<compile_context>
chip_gen: v7x
topology: tpu7x:2x2x1
jax: 0.10.0
libtpu: 0.0.40
codegen_flags: <defaults>
</compile_context>

<pallas_src>
import jax
import jax.numpy as jnp
import numpy as np
from jax.experimental import pallas as pl
from jax.experimental.pallas import tpu as pltpu

LANE = 128                 # lane width of one spatial tile
MAX_BLOCK_ROWS = 1024      # ~1.5 MiB per input block -> 6 MiB double-buffered (fits all gens)

_CONV = np.array(
    [[0.299, 0.587, 0.114],
     [-0.1687, -0.3313, 0.5],
     [0.5, -0.4187, -0.0813]], dtype=np.float32)


def _pick_block_rows(rows_total, max_rows=MAX_BLOCK_ROWS):
    """Largest multiple-of-8 divisor of rows_total that is <= max_rows (or full extent)."""
    if rows_total <= max_rows:
        return rows_total
    start = max_rows - (max_rows % 8)
    for r in range(start, 7, -8):
        if rows_total % r == 0:
            return r
    # Fall back to the full extent (always a legal block; may use more VMEM).
    return rows_total


def _make_kernel(block_rows):
    """Kernel over (3, block_rows, 128) RGB slabs (batch dim squeezed via BlockSpec)."""
    reduce_to_8 = (block_rows % 8 == 0) and (block_rows > 8)

    def kernel(a_ref, b_ref, o_ref):
        @pl.when((pl.program_id(0) == 0) & (pl.program_id(1) == 0))
        def _():
            o_ref[...] = jnp.zeros_like(o_ref)

        # Diff first (offsets cancel), then one 3x3 transform of the diff.
        dr = b_ref[0].astype(jnp.float32) - a_ref[0].astype(jnp.float32)
        dg = b_ref[1].astype(jnp.float32) - a_ref[1].astype(jnp.float32)
        db = b_ref[2].astype(jnp.float32) - a_ref[2].astype(jnp.float32)

        dy = 0.299 * dr + 0.587 * dg + 0.114 * db
        du = (-0.1687) * dr + (-0.3313) * dg + 0.5 * db
        dv = 0.5 * dr + (-0.4187) * dg + (-0.0813) * db

        for c, d in enumerate((dy, du, dv)):
            sq = d * d                                           # (block_rows, 128)
            if reduce_to_8:
                # vreg-aligned tree reduction: (R,128)->(R/8,8,128)->sum over leading axis
                sq = sq.reshape(block_rows // 8, 8, LANE).sum(axis=0)
            o_ref[c] += sq                                       # resident accumulator row

    return kernel


def yuv_mse_loss(im0, im1):
    """Pallas implementation of YUV_MSELoss.forward(im0, im1)."""
    N, C, H, W = im0.shape
    assert C == 3, "inputs must be RGB (N, 3, H, W)"
    HW = H * W
    rows_total = HW // LANE
    main = rows_total * LANE

    sums = jnp.zeros((3,), jnp.float32)   # per-channel sum of squared YUV diffs

    if rows_total > 0:
        a = im0.reshape(N, 3, HW)[:, :, :main].reshape(N, 3, rows_total, LANE)
        b = im1.reshape(N, 3, HW)[:, :, :main].reshape(N, 3, rows_total, LANE)

        rows = _pick_block_rows(rows_total)
        acc_rows = 8 if (rows % 8 == 0 and rows >= 8) else rows
        itemsize = int(np.dtype(im0.dtype).itemsize)

        partial = pl.pallas_call(
            _make_kernel(rows),
            out_shape=jax.ShapeDtypeStruct((3, acc_rows, LANE), jnp.float32),
            grid_spec=pltpu.PrefetchScalarGridSpec(
                num_scalar_prefetch=0,
                grid=(N, rows_total // rows),
                in_specs=[
                    pl.BlockSpec((None, 3, rows, LANE), lambda i, j: (i, 0, j, 0)),
                    pl.BlockSpec((None, 3, rows, LANE), lambda i, j: (i, 0, j, 0)),
                ],
                out_specs=pl.BlockSpec((3, acc_rows, LANE), lambda i, j: (0, 0, 0)),
            ),
            compiler_params=pltpu.CompilerParams(
                dimension_semantics=("arbitrary", "arbitrary"),
            ),
            cost_estimate=pl.CostEstimate(
                flops=24 * N * 3 * main,
                transcendentals=0,
                bytes_accessed=2 * 3 * N * main * itemsize + 3 * acc_rows * LANE * 4,
            ),
        )(a, b)

        sums = sums + jnp.sum(partial, axis=(1, 2))

    if main < HW:
        # Tail (< 128 pixels per image) handled in plain JAX; negligible cost.
        conv = jnp.asarray(_CONV)
        a_t = im0.reshape(N, 3, HW)[:, :, main:].astype(jnp.float32)
        b_t = im1.reshape(N, 3, HW)[:, :, main:].astype(jnp.float32)
        dyuv = jnp.einsum("ck,nkt->nct", conv, b_t - a_t)
        sums = sums + jnp.sum(dyuv * dyuv, axis=(0, 2))

    mse_per_channel = sums / float(N * H * W)    # torch.mean over (N, H, W) per channel
    psnr_weights = jnp.array([6.0 / 8.0, 1.0 / 8.0, 1.0 / 8.0], dtype=jnp.float32)
    return jnp.prod(mse_per_channel ** psnr_weights)


def _reference_loss(im0, im1):
    """Pure-JAX reference mirroring the PyTorch module exactly (offsets included)."""
    conv = jnp.asarray(_CONV)
    off = jnp.array([0.0, 128.0, 128.0], dtype=jnp.float32)

    def rgb2yuv(x):
        y = jnp.einsum("ck,nkhw->nchw", conv, x.astype(jnp.float32))
        return y + off[None, :, None, None]

    y0 = rgb2yuv(im0)
    y1 = rgb2yuv(im1)
    mse_c = jnp.mean((y1 - y0) ** 2, axis=(0, 2, 3))
    w = jnp.array([6.0 / 8.0, 1.0 / 8.0, 1.0 / 8.0], dtype=jnp.float32)
    return jnp.prod(mse_c ** w)


if __name__ == "__main__":
    key = jax.random.PRNGKey(0)
    k0, k1, k2, k3 = jax.random.split(key, 4)

    # Small, module-consistent shapes: batch=2, 3 RGB channels, 16x16 spatial,
    # pixel values in [0, 255) like typical image tensors.
    im0 = jax.random.uniform(k0, (2, 3, 16, 16), dtype=jnp.float32) * 255.0
    im1 = jax.random.uniform(k1, (2, 3, 16, 16), dtype=jnp.float32) * 255.0
    out = yuv_mse_loss(im0, im1)
    jax.block_until_ready(out)
    np.testing.assert_allclose(np.asarray(out), np.asarray(_reference_loss(im0, im1)),
                               rtol=1e-4, atol=1e-4)

    # Second shape exercising the in-kernel (ROWS//8, 8, 128) reduction path.
    jm0 = jax.random.uniform(k2, (1, 3, 32, 64), dtype=jnp.float32) * 255.0
    jm1 = jax.random.uniform(k3, (1, 3, 32, 64), dtype=jnp.float32) * 255.0
    out2 = yuv_mse_loss(jm0, jm1)
    jax.block_until_ready(out2)
    np.testing.assert_allclose(np.asarray(out2), np.asarray(_reference_loss(jm0, jm1)),
                               rtol=1e-4, atol=1e-4)

    print("KERNEL_OK")
</pallas_src>

<mosaic_0001>
module attributes {stable_mosaic.version = 11 : i64} {
  func.func @kernel(%arg0: i32, %arg1: i32, %arg2: memref<1x3x2x128xf32, #tpu.memory_space<vmem>>, %arg3: memref<1x3x2x128xf32, #tpu.memory_space<vmem>>, %arg4: memref<3x2x128xf32, #tpu.memory_space<vmem>>) attributes {dimension_semantics = [#tpu.dimension_semantics<arbitrary>, #tpu.dimension_semantics<arbitrary>], iteration_bounds = array<i64: 2, 1>, scalar_prefetch = 0 : i64, scratch_operands = 0 : i64, tpu.core_type = #tpu.core_type<tc>, window_params = [{transform_indices = @transform_0, window_bounds = array<i64: 1, 3, 2, 128>}, {transform_indices = @transform_1, window_bounds = array<i64: 1, 3, 2, 128>}, {pipeline_mode = #tpu.pipeline_mode<synchronous>, transform_indices = @transform_2, window_bounds = array<i64: 3, 2, 128>}]} {
    %c0_i32 = arith.constant 0 : i32
    %0 = arith.cmpi eq, %arg0, %c0_i32 : i32
    %c0_i32_0 = arith.constant 0 : i32
    %1 = arith.cmpi eq, %arg1, %c0_i32_0 : i32
    %2 = arith.andi %0, %1 : i1
    %3 = arith.extui %2 : i1 to i32
    %c0_i32_1 = arith.constant 0 : i32
    %4 = arith.cmpi ne, %3, %c0_i32_1 : i32
    scf.if %4 {
      %cst_49 = arith.constant 0.000000e+00 : f32
      %65 = vector.broadcast %cst_49 : f32 to vector<3x2x128xf32>
      %c0_50 = arith.constant 0 : index
      %c0_51 = arith.constant 0 : index
      %c0_52 = arith.constant 0 : index
      %66 = vector.load %arg4[%c0_50, %c0_51, %c0_52] : memref<3x2x128xf32, #tpu.memory_space<vmem>>, vector<3x2x128xf32>
      tpu.vector_store %arg4[%c0_50, %c0_51, %c0_52], %65 {strides = array<i32>} : memref<3x2x128xf32, #tpu.memory_space<vmem>>, vector<3x2x128xf32>,
    } else {
    }
    %c0 = arith.constant 0 : index
    %c0_2 = arith.constant 0 : index
    %c0_3 = arith.constant 0 : index
    %c0_4 = arith.constant 0 : index
    %5 = vector.load %arg3[%c0, %c0_2, %c0_3, %c0_4] : memref<1x3x2x128xf32, #tpu.memory_space<vmem>>, vector<1x1x2x128xf32>
    %6 = vector.shape_cast %5 : vector<1x1x2x128xf32> to vector<2x128xf32>
    %c0_5 = arith.constant 0 : index
    %c0_6 = arith.constant 0 : index
    %c0_7 = arith.constant 0 : index
    %c0_8 = arith.constant 0 : index
    %7 = vector.load %arg2[%c0_5, %c0_6, %c0_7, %c0_8] : memref<1x3x2x128xf32, #tpu.memory_space<vmem>>, vector<1x1x2x128xf32>
    %8 = vector.shape_cast %7 : vector<1x1x2x128xf32> to vector<2x128xf32>
    %9 = arith.subf %6, %8 : vector<2x128xf32>
    %c0_9 = arith.constant 0 : index
    %c1 = arith.constant 1 : index
    %c0_10 = arith.constant 0 : index
    %c0_11 = arith.constant 0 : index
    %10 = vector.load %arg3[%c0_9, %c1, %c0_10, %c0_11] : memref<1x3x2x128xf32, #tpu.memory_space<vmem>>, vector<1x1x2x128xf32>
    %11 = vector.shape_cast %10 : vector<1x1x2x128xf32> to vector<2x128xf32>
    %c0_12 = arith.constant 0 : index
    %c1_13 = arith.constant 1 : index
    %c0_14 = arith.constant 0 : index
    %c0_15 = arith.constant 0 : index
    %12 = vector.load %arg2[%c0_12, %c1_13, %c0_14, %c0_15] : memref<1x3x2x128xf32, #tpu.memory_space<vmem>>, vector<1x1x2x128xf32>
    %13 = vector.shape_cast %12 : vector<1x1x2x128xf32> to vector<2x128xf32>
    %14 = arith.subf %11, %13 : vector<2x128xf32>
    %c0_16 = arith.constant 0 : index
    %c2 = arith.constant 2 : index
    %c0_17 = arith.constant 0 : index
    %c0_18 = arith.constant 0 : index
    %15 = vector.load %arg3[%c0_16, %c2, %c0_17, %c0_18] : memref<1x3x2x128xf32, #tpu.memory_space<vmem>>, vector<1x1x2x128xf32>
    %16 = vector.shape_cast %15 : vector<1x1x2x128xf32> to vector<2x128xf32>
    %c0_19 = arith.constant 0 : index
    %c2_20 = arith.constant 2 : index
    %c0_21 = arith.constant 0 : index
    %c0_22 = arith.constant 0 : index
    %17 = vector.load %arg2[%c0_19, %c2_20, %c0_21, %c0_22] : memref<1x3x2x128xf32, #tpu.memory_space<vmem>>, vector<1x1x2x128xf32>
    %18 = vector.shape_cast %17 : vector<1x1x2x128xf32> to vector<2x128xf32>
    %19 = arith.subf %16, %18 : vector<2x128xf32>
    %cst = arith.constant 2.990000e-01 : f32
    %20 = vector.broadcast %cst : f32 to vector<2x128xf32>
    %21 = arith.mulf %20, %9 : vector<2x128xf32>
    %cst_23 = arith.constant 5.870000e-01 : f32
    %22 = vector.broadcast %cst_23 : f32 to vector<2x128xf32>
    %23 = arith.mulf %22, %14 : vector<2x128xf32>
    %24 = arith.addf %21, %23 : vector<2x128xf32>
    %cst_24 = arith.constant 1.140000e-01 : f32
    %25 = vector.broadcast %cst_24 : f32 to vector<2x128xf32>
    %26 = arith.mulf %25, %19 : vector<2x128xf32>
    %27 = arith.addf %24, %26 : vector<2x128xf32>
    %cst_25 = arith.constant -1.687000e-01 : f32
    %28 = vector.broadcast %cst_25 : f32 to vector<2x128xf32>
    %29 = arith.mulf %28, %9 : vector<2x128xf32>
    %cst_26 = arith.constant -3.313000e-01 : f32
    %30 = vector.broadcast %cst_26 : f32 to vector<2x128xf32>
    %31 = arith.mulf %30, %14 : vector<2x128xf32>
    %32 = arith.addf %29, %31 : vector<2x128xf32>
    %cst_27 = arith.constant 5.000000e-01 : f32
    %33 = vector.broadcast %cst_27 : f32 to vector<2x128xf32>
    %34 = arith.mulf %33, %19 : vector<2x128xf32>
    %35 = arith.addf %32, %34 : vector<2x128xf32>
    %cst_28 = arith.constant 5.000000e-01 : f32
    %36 = vector.broadcast %cst_28 : f32 to vector<2x128xf32>
    %37 = arith.mulf %36, %9 : vector<2x128xf32>
    %cst_29 = arith.constant -4.187000e-01 : f32
    %38 = vector.broadcast %cst_29 : f32 to vector<2x128xf32>
    %39 = arith.mulf %38, %14 : vector<2x128xf32>
    %40 = arith.addf %37, %39 : vector<2x128xf32>
    %cst_30 = arith.constant -0.0812999978 : f32
    %41 = vector.broadcast %cst_30 : f32 to vector<2x128xf32>
    %42 = arith.mulf %41, %19 : vector<2x128xf32>
    %43 = arith.addf %40, %42 : vector<2x128xf32>
    %44 = arith.mulf %27, %27 : vector<2x128xf32>
    %c0_31 = arith.constant 0 : index
    %c0_32 = arith.constant 0 : index
    %c0_33 = arith.constant 0 : index
    %45 = vector.load %arg4[%c0_31, %c0_32, %c0_33] : memref<3x2x128xf32, #tpu.memory_space<vmem>>, vector<1x2x128xf32>
    %46 = vector.shape_cast %45 : vector<1x2x128xf32> to vector<2x128xf32>
    %47 = arith.addf %46, %44 : vector<2x128xf32>
    %c0_34 = arith.constant 0 : index
    %c0_35 = arith.constant 0 : index
    %c0_36 = arith.constant 0 : index
    %48 = vector.load %arg4[%c0_34, %c0_35, %c0_36] : memref<3x2x128xf32, #tpu.memory_space<vmem>>, vector<1x2x128xf32>
    %49 = vector.shape_cast %48 : vector<1x2x128xf32> to vector<2x128xf32>
    %50 = vector.shape_cast %47 : vector<2x128xf32> to vector<1x2x128xf32>
    tpu.vector_store %arg4[%c0_34, %c0_35, %c0_36], %50 {strides = array<i32>} : memref<3x2x128xf32, #tpu.memory_space<vmem>>, vector<1x2x128xf32>,
    %51 = arith.mulf %35, %35 : vector<2x128xf32>
    %c1_37 = arith.constant 1 : index
    %c0_38 = arith.constant 0 : index
    %c0_39 = arith.constant 0 : index
    %52 = vector.load %arg4[%c1_37, %c0_38, %c0_39] : memref<3x2x128xf32, #tpu.memory_space<vmem>>, vector<1x2x128xf32>
    %53 = vector.shape_cast %52 : vector<1x2x128xf32> to vector<2x128xf32>
    %54 = arith.addf %53, %51 : vector<2x128xf32>
    %c1_40 = arith.constant 1 : index
    %c0_41 = arith.constant 0 : index
    %c0_42 = arith.constant 0 : index
    %55 = vector.load %arg4[%c1_40, %c0_41, %c0_42] : memref<3x2x128xf32, #tpu.memory_space<vmem>>, vector<1x2x128xf32>
    %56 = vector.shape_cast %55 : vector<1x2x128xf32> to vector<2x128xf32>
    %57 = vector.shape_cast %54 : vector<2x128xf32> to vector<1x2x128xf32>
    tpu.vector_store %arg4[%c1_40, %c0_41, %c0_42], %57 {strides = array<i32>} : memref<3x2x128xf32, #tpu.memory_space<vmem>>, vector<1x2x128xf32>,
    %58 = arith.mulf %43, %43 : vector<2x128xf32>
    %c2_43 = arith.constant 2 : index
    %c0_44 = arith.constant 0 : index
    %c0_45 = arith.constant 0 : index
    %59 = vector.load %arg4[%c2_43, %c0_44, %c0_45] : memref<3x2x128xf32, #tpu.memory_space<vmem>>, vector<1x2x128xf32>
    %60 = vector.shape_cast %59 : vector<1x2x128xf32> to vector<2x128xf32>
    %61 = arith.addf %60, %58 : vector<2x128xf32>
    %c2_46 = arith.constant 2 : index
    %c0_47 = arith.constant 0 : index
    %c0_48 = arith.constant 0 : index
    %62 = vector.load %arg4[%c2_46, %c0_47, %c0_48] : memref<3x2x128xf32, #tpu.memory_space<vmem>>, vector<1x2x128xf32>
    %63 = vector.shape_cast %62 : vector<1x2x128xf32> to vector<2x128xf32>
    %64 = vector.shape_cast %61 : vector<2x128xf32> to vector<1x2x128xf32>
    tpu.vector_store %arg4[%c2_46, %c0_47, %c0_48], %64 {strides = array<i32>} : memref<3x2x128xf32, #tpu.memory_space<vmem>>, vector<1x2x128xf32>,
    return
  }
  func.func @transform_0(%arg0: i32, %arg1: i32) -> (i32, i32, i32, i32) {
    %c0_i32 = arith.constant 0 : i32
    %c0_i32_0 = arith.constant 0 : i32
    %c0_i32_1 = arith.constant 0 : i32
    return %arg0, %c0_i32, %arg1, %c0_i32_0 : i32, i32, i32, i32
  }
  func.func @transform_1(%arg0: i32, %arg1: i32) -> (i32, i32, i32, i32) {
    %c0_i32 = arith.constant 0 : i32
    %c0_i32_0 = arith.constant 0 : i32
    %c0_i32_1 = arith.constant 0 : i32
    return %arg0, %c0_i32, %arg1, %c0_i32_0 : i32, i32, i32, i32
  }
  func.func @transform_2(%arg0: i32, %arg1: i32) -> (i32, i32, i32) {
    %c0_i32 = arith.constant 0 : i32
    %c0_i32_0 = arith.constant 0 : i32
    %c0_i32_1 = arith.constant 0 : i32
    %c0_i32_2 = arith.constant 0 : i32
    return %c0_i32, %c0_i32_0, %c0_i32_1 : i32, i32, i32
  }
}

</mosaic_0001>

<llo_original>
// kernel: tpu_custom_call.1
$region0: #{tpu_custom_call.1}
  #allocation0 [shape = 'u32[]', space=smem, size = 0x4, offset = 0x4, fixed_abs, tag = 'smem constant byte address 0x4 - core index']
  #allocation1 [shape = 'u32[144,128]{1,0:T(1,128)}', space=vmem, size = 0x12000, scoped, tag = 'internal scratch']
  %s0 = inlined_call_operand.hbm [shape: f32[2,3,2,128], index: 0, kind: input, shape index: {}]
  %s1 = inlined_call_operand.hbm [shape: f32[2,3,2,128], index: 1, kind: input, shape index: {}]
  %s2 = inlined_call_operand.hbm [shape: f32[3,2,128], index: 2, kind: output, shape index: {}]
  %s3 = sld [smem:[#allocation0]]
  $region53: #{tpu_custom_call.1} parent=0
    _
  %s5 = ssub.s32 1, %s3
  %s6 = scalar_select 0, %s5, %s3
  $region1: #{tpu_custom_call.1} parent=0
    #allocation2 [shape = 'u8[6144]{0}', space=vmem, size = 0x1800, scoped, tag = 'input window, operand 0']
    #allocation3 [shape = 's32[2]{0}', space=sflag, size = 0x8, scoped, tag = 'scoped memory for tpu_custom_call.1']
    #allocation4 [shape = 's32[2]{0}', space=sflag, size = 0x8, scoped, tag = 'scoped memory for tpu_custom_call.1']
    #allocation5 [shape = 'u8[6144]{0}', space=vmem, size = 0x1800, scoped, tag = 'input window, operand 1']
    #allocation6 [shape = 's32[2]{0}', space=sflag, size = 0x8, scoped, tag = 'scoped memory for tpu_custom_call.1']
    #allocation7 [shape = 'u8[3072]{0}', space=vmem, size = 0xc00, scoped, tag = 'output window, operand 0, single buffered']
    %7 = vsyncpa [#allocation3], 0
    %s8 = scalar_lea.sflag [#allocation3], 1
    %9 = vsyncpa %s8, 0
    %10 = vsyncpa [#allocation6], 0
    %s11 = scalar_lea.sflag [#allocation6], 1
    %12 = vsyncpa %s11, 0
    %13 = vsyncpa [#allocation4], 0
    loop: start=0, step=1, limit=4
    $region2: #{tpu_custom_call.1} parent=1 // loop_pre_header
      _
    $region3: #{tpu_custom_call.1} parent=1 // loop_header
      %s15 = sphi 0, %s19
      %p16 = scmp.ge.s32.totalorder %s15, 4
      %s22 = sphi 0, %s34
      %s23 = sphi 0, %s30
      %s24 = sphi 0, %s22
      %s25 = sphi 0, %s23
      %s26 = sphi 0, %s24
      %s27 = sphi 0, %s25
      %s39 = sphi 0, %s41
      %s42 = sphi 0, %s39
      %s43 = sphi 0, %s42
      %s59 = sphi 0, %s43
      %s67 = sphi 0, %s69
      %s70 = sphi 0, %s67
      %s71 = sphi 0, %s70
      %s87 = sphi 0, %s71
      %s91 = sphi 0, %s91
      %s93 = sphi 0, %s91
      %s94 = sphi 0, %s93
      %s108 = sphi 0, %s94
    $region4: #{tpu_custom_call.1} parent=1 // loop_header_branch
      %18 = sbr.rel (%p16) target = $region8
    $region5: #{tpu_custom_call.1} parent=1 // loop_body
      %s20 = ssub.s32 %s15, 1
      %s21 = ssub.s32 %s15, 2
      %s28 = sadd.s32 1, %s23
      %p29 = scmp.ge.s32.totalorder %s28, 1
      %s30 = scalar_select %p29, 0, %s28
      %s31 = sadd.s32 1, %s22
      %s32 = scalar_select %p29, %s31, %s22
      %p33 = scmp.ge.s32.totalorder %s32, 2
      %s34 = scalar_select %p33, 0, %s32
      %s35 = ssub.s32 %s22, %s34
      %s36 = ssub.s32 %s23, %s30
      %s37 = sor.u32 %s35, %s36
      %p38 = scmp.eq.s32.totalorder %s37, 0
      %s40 = sadd.s32 %s39, 1
      %s41 = scalar_select %p38, %s39, %s40
      %p44 = pneg %p38
      %p45 = scmp.eq.s32.totalorder %s15, 1
      %p46 = por %p44, %p45
      %p47 = scmp.ne.s32.totalorder %s39, %s42
      %p48 = scmp.eq.s32.totalorder %s15, 0
      %p49 = por %p47, %p48
      %p50 = scmp.ne.s32.totalorder %s39, %s42
      %p51 = scmp.eq.s32.totalorder %s20, 1
      %p52 = por %p50, %p51
      %p53 = scmp.ne.s32.totalorder %s42, %s43
      %p54 = scmp.eq.s32.totalorder %s20, 0
      %p55 = por %p53, %p54
      %p56 = scmp.ne.s32.totalorder %s42, %s43
      %p57 = scmp.eq.s32.totalorder %s21, 1
      %p58 = por %p56, %p57
      %p60 = scmp.ne.s32.totalorder %s43, %s59
      %p61 = scmp.eq.s32.totalorder %s21, 0
      %p62 = por %p60, %p61
      %s63 = ssub.s32 %s22, %s34
      %s64 = ssub.s32 %s23, %s30
      %s65 = sor.u32 %s63, %s64
      %p66 = scmp.eq.s32.totalorder %s65, 0
      %s68 = sadd.s32 %s67, 1
      %s69 = scalar_select %p66, %s67, %s68
      %p72 = pneg %p66
      %p73 = scmp.eq.s32.totalorder %s15, 1
      %p74 = por %p72, %p73
      %p75 = scmp.ne.s32.totalorder %s67, %s70
      %p76 = scmp.eq.s32.totalorder %s15, 0
      %p77 = por %p75, %p76
      %p78 = scmp.ne.s32.totalorder %s67, %s70
      %p79 = scmp.eq.s32.totalorder %s20, 1
      %p80 = por %p78, %p79
      %p81 = scmp.ne.s32.totalorder %s70, %s71
      %p82 = scmp.eq.s32.totalorder %s20, 0
      %p83 = por %p81, %p82
      %p84 = scmp.ne.s32.totalorder %s70, %s71
      %p85 = scmp.eq.s32.totalorder %s21, 1
      %p86 = por %p84, %p85
      %p88 = scmp.ne.s32.totalorder %s71, %s87
      %p89 = scmp.eq.s32.totalorder %s21, 0
      %p90 = por %p88, %p89
      %s92 = sadd.s32 %s91, 1
      %p95 = scmp.eq.s32.totalorder %s15, 1
      %p96 = scmp.ne.s32.totalorder %s91, %s93
      %p97 = scmp.eq.s32.totalorder %s15, 0
      %p98 = por %p96, %p97
      %p99 = scmp.ne.s32.totalorder %s91, %s93
      %p100 = scmp.eq.s32.totalorder %s20, 1
      %p101 = por %p99, %p100
      %p102 = scmp.ne.s32.totalorder %s93, %s94
      %p103 = scmp.eq.s32.totalorder %s20, 0
      %p104 = por %p102, %p103
      %p105 = scmp.ne.s32.totalorder %s93, %s94
      %p106 = scmp.eq.s32.totalorder %s21, 1
      %p107 = por %p105, %p106
      %p109 = scmp.ne.s32.totalorder %s94, %s108
      %p110 = scmp.eq.s32.totalorder %s21, 0
      %p111 = por %p109, %p110
      %p112 = scmp.le.s32.totalorder 1, %s15
      %p113 = scmp.lt.s32.totalorder %s15, 3
      %p114 = pnand %p112, %p113
      %p115 = pneg %p114
      // Predicated region
      $region9: #{tpu_custom_call.1} parent=5 // pred_check
        _
      $region10: #{tpu_custom_call.1} parent=5 // pred_check_branch
        %117 = sbr.rel (%p114) target = $region12
      $region11: #{tpu_custom_call.1} parent=5 // pred_region
        %s118 = ssub.s32 %s15, 1
      $region12: #{tpu_custom_call.1} parent=5 // pred_fallthru
        _
      %p119 = scmp.lt.s32.totalorder %s15, 2
      // Predicated region
      $region13: #{tpu_custom_call.1} parent=5 // pred_check
        %p120 = pneg %p119
      $region14: #{tpu_custom_call.1} parent=5 // pred_check_branch
        %122 = sbr.rel (%p120) target = $region16
      $region15: #{tpu_custom_call.1} parent=5 // pred_region
        // Predicated region
        $region17: #{tpu_custom_call.1} parent=15 // pred_check
          %p123 = pneg %p49
        $region18: #{tpu_custom_call.1} parent=15 // pred_check_branch
          %125 = sbr.rel (%p123) target = $region20
        $region19: #{tpu_custom_call.1} parent=15 // pred_region
          %s126 = sand.u32 %s39, 1
          %s127 = scalar_lea.sflag [#allocation3], %s126
          %s128 = sand.u32 %s39, 1
          %s129 = smul.addr %s128, 6
          %s130 = scalar_lea.vmem [#allocation2], %s129
          %s132 = ssub.s32 96, 96
          %133 = vsyncadd %s127, %s132
          %s134 = smul.addr %s22, 3
          %s135 = sadd.s32 %s23, %s134
          %s136 = smul.addr %s135, 32
          %s137 = scalar_lea.hbm %s0, %s136
          %s138 = sshll.u32 %s130, 4
          %s139 = int_to_ptr.vmem [resolvable:$true] %s138
          %144 = dma.hbm_to_vmem [thread:$0]  %s137, 96, %s139, %s127, 32, 32, 2
        $region20: #{tpu_custom_call.1} parent=15 // pred_fallthru
          _
        // Predicated region
        $region21: #{tpu_custom_call.1} parent=15 // pred_check
          %p145 = pneg %p77
        $region22: #{tpu_custom_call.1} parent=15 // pred_check_branch
          %147 = sbr.rel (%p145) target = $region24
        $region23: #{tpu_custom_call.1} parent=15 // pred_region
          %s148 = sand.u32 %s67, 1
          %s149 = scalar_lea.sflag [#allocation6], %s148
          %s150 = sand.u32 %s67, 1
          %s151 = smul.addr %s150, 6
          %s152 = scalar_lea.vmem [#allocation5], %s151
          %s154 = ssub.s32 96, 96
          %155 = vsyncadd %s149, %s154
          %s156 = smul.addr %s22, 3
          %s157 = sadd.s32 %s23, %s156
          %s158 = smul.addr %s157, 32
          %s159 = scalar_lea.hbm %s1, %s158
          %s160 = sshll.u32 %s152, 4
          %s161 = int_to_ptr.vmem [resolvable:$true] %s160
          %166 = dma.hbm_to_vmem [thread:$0]  %s159, 96, %s161, %s149, 32, 32, 2
        $region24: #{tpu_custom_call.1} parent=15 // pred_fallthru
          _
      $region16: #{tpu_custom_call.1} parent=5 // pred_fallthru
        _
      %p167 = scmp.le.s32.totalorder 1, %s15
      %p168 = scmp.lt.s32.totalorder %s15, 3
      %p169 = pnand %p167, %p168
      %p170 = pneg %p169
      // Predicated region
      $region25: #{tpu_custom_call.1} parent=5 // pred_check
        _
      $region26: #{tpu_custom_call.1} parent=5 // pred_check_branch
        %172 = sbr.rel (%p169) target = $region28
      $region27: #{tpu_custom_call.1} parent=5 // pred_region
        %s173 = ssub.s32 %s15, 1
        %s174 = sand.u32 %s42, 1
        %s175 = scalar_lea.sflag [#allocation3], %s174
        %s176 = sand.u32 %s42, 1
        %s177 = smul.addr %s176, 6
        %s178 = scalar_lea.vmem [#allocation2], %s177
        // Predicated region
        $region29: #{tpu_custom_call.1} parent=27 // pred_check
          %p179 = pneg %p55
        $region30: #{tpu_custom_call.1} parent=27 // pred_check_branch
          %181 = sbr.rel (%p179) target = $region32
        $region31: #{tpu_custom_call.1} parent=27 // pred_region
          %182 = dma.done %s175, 96
        $region32: #{tpu_custom_call.1} parent=27 // pred_fallthru
          _
        %s183 = sand.u32 %s70, 1
        %s184 = scalar_lea.sflag [#allocation6], %s183
        %s185 = sand.u32 %s70, 1
        %s186 = smul.addr %s185, 6
        %s187 = scalar_lea.vmem [#allocation5], %s186
        // Predicated region
        $region33: #{tpu_custom_call.1} parent=27 // pred_check
          %p188 = pneg %p83
        $region34: #{tpu_custom_call.1} parent=27 // pred_check_branch
          %190 = sbr.rel (%p188) target = $region36
        $region35: #{tpu_custom_call.1} parent=27 // pred_region
          %191 = dma.done %s184, 96
        $region36: #{tpu_custom_call.1} parent=27 // pred_fallthru
          _
        %s192 = sand.u32 %s42, 1
        %s193 = scalar_lea.sflag [#allocation3], %s192
        %s194 = sand.u32 %s42, 1
        %s195 = smul.addr %s194, 6
        %s196 = scalar_lea.vmem [#allocation2], %s195
        %p197 = pneg %p55
        %p198 = pneg %p52
        %s199 = sand.u32 %s70, 1
        %s200 = scalar_lea.sflag [#allocation6], %s199
        %s201 = sand.u32 %s70, 1
        %s202 = smul.addr %s201, 6
        %s203 = scalar_lea.vmem [#allocation5], %s202
        %p204 = pneg %p83
        %p205 = pneg %p80
        %p206 = pneg %p104
        %p207 = pneg %p101
        %p208 = scmp.eq.s32.totalorder %s24, 0
        %p209 = scmp.eq.s32.totalorder %s25, 0
        %p210 = pnand %p208, %p209
        %p211 = pneg %p210
        // Predicated region
        $region37: #{tpu_custom_call.1} parent=27 // pred_check
          _
        $region38: #{tpu_custom_call.1} parent=27 // pred_check_branch
          %213 = sbr.rel (%p210) target = $region40
        $region39: #{tpu_custom_call.1} parent=27 // pred_region
          %214 = vst [vmem:[#allocation7] sm:$0x3] 0.0
          %215 = vst [vmem:[#allocation7 + $0x2] sm:$0x3] 0.0
          %216 = vst [vmem:[#allocation7 + $0x4] sm:$0x3] 0.0
        $region40: #{tpu_custom_call.1} parent=27 // pred_fallthru
          _
        %v217 = vld [vmem:[%s187] sm:$0x3]
        %v218 = vld [vmem:[%s178] sm:$0x3]
        %v219 = vsub.f32 %v217, %v218
        %s220 = scalar_lea.vmem %s187, 2 [#allocation5]
        %v221 = vld [vmem:[%s220] sm:$0x3]
        %s222 = scalar_lea.vmem %s178, 2 [#allocation2]
        %v223 = vld [vmem:[%s222] sm:$0x3]
        %v224 = vsub.f32 %v221, %v223
        %s225 = scalar_lea.vmem %s187, 4 [#allocation5]
        %v226 = vld [vmem:[%s225] sm:$0x3]
        %s227 = scalar_lea.vmem %s178, 4 [#allocation2]
        %v228 = vld [vmem:[%s227] sm:$0x3]
        %v229 = vsub.f32 %v226, %v228
        %v230 = vmul.f32 %v219, 0.299
        %v231 = vmul.f32 %v224, 0.587
        %v232 = vadd.f32 %v230, %v231
        %v233 = vmul.f32 %v229, 0.114
        %v234 = vadd.f32 %v232, %v233
        %v235 = vmul.f32 %v219, -0.1687
        %v236 = vmul.f32 %v224, -0.3313
        %v237 = vadd.f32 %v235, %v236
        %v238 = vmul.f32 %v229, 0.5
        %v239 = vadd.f32 %v237, %v238
        %v240 = vmul.f32 %v219, 0.5
        %v241 = vmul.f32 %v224, -0.4187
        %v242 = vadd.f32 %v240, %v241
        %v243 = vmul.f32 %v229, -0.0813
        %v244 = vadd.f32 %v242, %v243
        %v245 = vmul.f32 %v234, %v234
        %v246 = vld [vmem:[#allocation7] sm:$0x3]
        %v247 = vadd.f32 %v246, %v245
        %248 = vst [vmem:[#allocation7] sm:$0x3] %v247
        %v249 = vmul.f32 %v239, %v239
        %s250 = scalar_lea.vmem [#allocation7], 2
        %v251 = vld [vmem:[%s250] sm:$0x3]
        %v252 = vadd.f32 %v251, %v249
        %253 = vst [vmem:[%s250] sm:$0x3] %v252
        %v254 = vmul.f32 %v244, %v244
        %s255 = scalar_lea.vmem [#allocation7], 4
        %v256 = vld [vmem:[%s255] sm:$0x3]
        %v257 = vadd.f32 %v256, %v254
        %258 = vst [vmem:[%s255] sm:$0x3] %v257
        // Predicated region
        $region41: #{tpu_custom_call.1} parent=27 // pred_check
          %p259 = pneg %p101
        $region42: #{tpu_custom_call.1} parent=27 // pred_check_branch
          %261 = sbr.rel (%p259) target = $region44
        $region43: #{tpu_custom_call.1} parent=27 // pred_region
          %s263 = ssub.s32 96, 96
          %264 = vsyncadd [#allocation4], %s263
          %s265 = sshll.u32 [#allocation7], 4
          %s266 = int_to_ptr.vmem [resolvable:$true] %s265
          %271 = dma.vmem_to_hbm [thread:$0]  %s266, 96, %s2, [#allocation4], 32, 32, 2
        $region44: #{tpu_custom_call.1} parent=27 // pred_fallthru
          _
        // Predicated region
        $region45: #{tpu_custom_call.1} parent=27 // pred_check
          %p272 = pneg %p101
        $region46: #{tpu_custom_call.1} parent=27 // pred_check_branch
          %274 = sbr.rel (%p272) target = $region48
        $region47: #{tpu_custom_call.1} parent=27 // pred_region
          %275 = dma.done [#allocation4], 96
        $region48: #{tpu_custom_call.1} parent=27 // pred_fallthru
          _
      $region28: #{tpu_custom_call.1} parent=5 // pred_fallthru
        _
      %p276 = scmp.le.s32.totalorder 2, %s15
      // Predicated region
      $region49: #{tpu_custom_call.1} parent=5 // pred_check
        %p277 = pneg %p276
      $region50: #{tpu_custom_call.1} parent=5 // pred_check_branch
        %279 = sbr.rel (%p277) target = $region52
      $region51: #{tpu_custom_call.1} parent=5 // pred_region
        %s280 = ssub.s32 %s15, 2
      $region52: #{tpu_custom_call.1} parent=5 // pred_fallthru
        _
    $region6: #{tpu_custom_call.1} parent=1 // loop_footer
      %s19 = sadd.s32 1, %s15
    $region7: #{tpu_custom_call.1} parent=1 // loop_footer_branch
      %14 = sbr.rel target = $region3
    $region8: #{tpu_custom_call.1} parent=1 // loop_exit
      _
    %281 = vsyncpa [#allocation3], 1
    %s282 = scalar_lea.sflag [#allocation3], 1
    %283 = vsyncpa %s282, 1
    %284 = vsyncpa [#allocation6], 1
    %s285 = scalar_lea.sflag [#allocation6], 1
    %286 = vsyncpa %s285, 1
    %287 = vsyncpa [#allocation4], 1
    %s288 = scalar_lea.sflag [#allocation4], 1
    %289 = vsyncpa %s288, 1

</llo_original>
